<compile_context>
chip_gen: v7x
topology: tpu7x:2x2x1
jax: 0.10.0
libtpu: 0.0.40
codegen_flags: <defaults>
</compile_context>

<pallas_src>
import functools

import jax
import jax.numpy as jnp
from jax.experimental import pallas as pl
from jax.experimental.pallas import tpu as pltpu


def _round_up(x, m):
    return (x + m - 1) // m * m


def _pick_k_tile(k):
    kp = _round_up(k, 128)
    for t in (512, 256, 128):
        if kp % t == 0:
            return t, kp
    return 128, kp


def _pick_n_tile(n):
    np_ = _round_up(n, 128)
    for t in (256, 128):
        if np_ % t == 0:
            return t, np_
    return 128, np_


def _pick_m_tile(m):
    mp = _round_up(m, 16)           # 16-row alignment (bf16 sublane packing)
    if mp <= 256:
        return mp, mp
    return 256, _round_up(m, 256)


# --------------------------------------------------------------------------------------
# Fused Pallas matmul kernel:  act((A @ B) * scale + bias [+ residual])
# --------------------------------------------------------------------------------------

def _mm_fused_kernel(a_ref, b_ref, *rest, relu, sigmoid, has_scale, has_residual):
    idx = 0
    if has_scale:
        scale_ref, bias_ref = rest[0], rest[1]
        idx = 2
    if has_residual:
        res_ref = rest[idx]
        idx += 1
    o_ref, acc_ref = rest[idx], rest[idx + 1]

    k = pl.program_id(2)

    @pl.when(k == 0)
    def _():
        acc_ref[...] = jnp.zeros_like(acc_ref)

    acc_ref[...] += jnp.dot(a_ref[...], b_ref[...], preferred_element_type=jnp.float32)

    @pl.when(k == pl.num_programs(2) - 1)
    def _():
        r = acc_ref[...]
        if has_scale:
            r = r * scale_ref[...] + bias_ref[...]
        if has_residual:
            r = r + res_ref[...].astype(jnp.float32)
        if relu:
            r = jnp.maximum(r, 0.0)
        if sigmoid:
            r = 1.0 / (1.0 + jnp.exp(-r))
        o_ref[...] = r.astype(o_ref.dtype)


def fused_matmul(A, B, scale=None, bias=None, residual=None, *,
                 relu=False, sigmoid=False, out_dtype=jnp.bfloat16):
    """out = act((A @ B) * scale + bias [+ residual]); A:[M,K], B:[K,N], scale/bias:[N]."""
    M, K = A.shape
    K2, N = B.shape
    assert K2 == K
    TM, Mp = _pick_m_tile(M)
    TN, Np = _pick_n_tile(N)
    TK, Kp = _pick_k_tile(K)

    A = A.astype(jnp.bfloat16)
    B = B.astype(jnp.bfloat16)
    if (Mp, Kp) != (M, K):
        A = jnp.pad(A, ((0, Mp - M), (0, Kp - K)))
    if (Kp, Np) != (K, N):
        B = jnp.pad(B, ((0, Kp - K), (0, Np - N)))

    inputs = [A, B]
    in_specs = [pl.BlockSpec((TM, TK), lambda i, j, k: (i, k)),
                pl.BlockSpec((TK, TN), lambda i, j, k: (k, j))]

    has_scale = scale is not None
    if has_scale:
        s = scale.astype(jnp.float32).reshape(1, N)
        b = bias.astype(jnp.float32).reshape(1, N)
        if Np != N:
            s = jnp.pad(s, ((0, 0), (0, Np - N)))
            b = jnp.pad(b, ((0, 0), (0, Np - N)))
        inputs += [s, b]
        in_specs += [pl.BlockSpec((1, TN), lambda i, j, k: (0, j)),
                     pl.BlockSpec((1, TN), lambda i, j, k: (0, j))]

    has_residual = residual is not None
    if has_residual:
        r = residual.astype(jnp.bfloat16)
        if (Mp, Np) != (M, N):
            r = jnp.pad(r, ((0, Mp - M), (0, Np - N)))
        inputs.append(r)
        in_specs.append(pl.BlockSpec((TM, TN), lambda i, j, k: (i, j)))

    out_itemsize = jnp.dtype(out_dtype).itemsize
    cost = pl.CostEstimate(
        flops=2 * Mp * Np * Kp,
        transcendentals=Mp * Np if sigmoid else 0,
        bytes_accessed=(Mp * Kp + Kp * Np) * 2 + Mp * Np * out_itemsize
                       + (Mp * Np * 2 if has_residual else 0))

    out = pl.pallas_call(
        functools.partial(_mm_fused_kernel, relu=relu, sigmoid=sigmoid,
                          has_scale=has_scale, has_residual=has_residual),
        out_shape=jax.ShapeDtypeStruct((Mp, Np), out_dtype),
        grid_spec=pltpu.PrefetchScalarGridSpec(
            num_scalar_prefetch=0,
            grid=(Mp // TM, Np // TN, Kp // TK),
            in_specs=in_specs,
            out_specs=pl.BlockSpec((TM, TN), lambda i, j, k: (i, j)),
            scratch_shapes=[pltpu.VMEM((TM, TN), jnp.float32)]),
        compiler_params=pltpu.CompilerParams(
            dimension_semantics=("parallel", "parallel", "arbitrary"),
            vmem_limit_bytes=32 * 1024 * 1024),
        cost_estimate=cost,
    )(*inputs)

    if (Mp, Np) != (M, N):
        out = out[:M, :N]
    return out


# --------------------------------------------------------------------------------------
# Conv / pool / interpolate built on the fused Pallas matmul
# --------------------------------------------------------------------------------------

def conv2d_bn_act(x, w, scale, bias, *, stride=1, padding=0, dilation=1,
                  relu=True, residual=None, sigmoid=False, out_dtype=jnp.bfloat16):
    """x: [N,H,W,Cin] NHWC (bf16), w: [Kh,Kw,Cin,Cout] (bf16).
    Fused Conv + folded-BN/bias + optional residual add + ReLU/sigmoid."""
    N, H, W, Cin = x.shape
    Kh, Kw, _, Cout = w.shape
    if Kh == 1 and Kw == 1 and padding == 0:
        xs = x[:, ::stride, ::stride, :] if stride > 1 else x
        Ho, Wo = xs.shape[1], xs.shape[2]
        A = xs.reshape(N * Ho * Wo, Cin)
    else:
        Ho = (H + 2 * padding - dilation * (Kh - 1) - 1) // stride + 1
        Wo = (W + 2 * padding - dilation * (Kw - 1) - 1) // stride + 1
        xp = jnp.pad(x, ((0, 0), (padding, padding), (padding, padding), (0, 0)))
        # TODO(synk): stream the (kh,kw) taps through the matmul K grid axis (manual DMA of
        # shifted NHWC windows) instead of materializing the im2col buffer; bf16 activations
        # already halve its HBM footprint in the meantime.
        cols = []
        for kh in range(Kh):
            for kw in range(Kw):
                h0 = kh * dilation
                w0 = kw * dilation
                cols.append(xp[:, h0:h0 + (Ho - 1) * stride + 1:stride,
                               w0:w0 + (Wo - 1) * stride + 1:stride, :])
        A = jnp.concatenate(cols, axis=-1).reshape(N * Ho * Wo, Kh * Kw * Cin)
    B = w.reshape(Kh * Kw * Cin, Cout)
    res2 = residual.reshape(N * Ho * Wo, Cout) if residual is not None else None
    out = fused_matmul(A, B, scale, bias, res2,
                       relu=relu, sigmoid=sigmoid, out_dtype=out_dtype)
    return out.reshape(N, Ho, Wo, Cout)


def maxpool_3x3_s2_p1(x):
    N, H, W, C = x.shape
    Ho = (H + 2 - 3) // 2 + 1
    Wo = (W + 2 - 3) // 2 + 1
    xp = jnp.pad(x, ((0, 0), (1, 1), (1, 1), (0, 0)), constant_values=-jnp.inf)
    out = None
    for kh in range(3):
        for kw in range(3):
            s = xp[:, kh:kh + (Ho - 1) * 2 + 1:2, kw:kw + (Wo - 1) * 2 + 1:2, :]
            out = s if out is None else jnp.maximum(out, s)
    return out


def _interp_weights(in_size, out_size):
    # Exact PyTorch F.interpolate(mode='bilinear', align_corners=False) index math.
    scale = in_size / out_size
    dst = jnp.arange(out_size, dtype=jnp.float32)
    src = jnp.maximum((dst + 0.5) * scale - 0.5, 0.0)
    i0 = jnp.clip(jnp.floor(src).astype(jnp.int32), 0, in_size - 1)
    i1 = jnp.minimum(i0 + 1, in_size - 1)
    frac = src - i0.astype(jnp.float32)
    Wm = jnp.zeros((out_size, in_size), jnp.float32)
    rows = jnp.arange(out_size)
    Wm = Wm.at[rows, i0].add(1.0 - frac)
    Wm = Wm.at[rows, i1].add(frac)
    return Wm


def bilinear_resize_sigmoid(x, H_out, W_out):
    """x: [N,h,w,C] -> sigmoid(bilinear(x)): [N,H_out,W_out,C] f32.
    Both contractions run on the fused Pallas matmul; the sigmoid is fused into the
    epilogue of the second matmul (no standalone elementwise pass)."""
    N, h, w, C = x.shape
    Wh = _interp_weights(h, H_out)
    Ww = _interp_weights(w, W_out)
    # contract over h  (no scale/bias inputs at all)
    x1 = jnp.transpose(x, (1, 0, 2, 3)).reshape(h, N * w * C)
    y1 = fused_matmul(Wh, x1, out_dtype=jnp.bfloat16)
    y1 = y1.reshape(H_out, N, w, C)
    # contract over w, with the final sigmoid fused
    x2 = jnp.transpose(y1, (2, 1, 0, 3)).reshape(w, N * H_out * C)
    y2 = fused_matmul(Ww, x2, sigmoid=True, out_dtype=jnp.float32)
    y2 = y2.reshape(W_out, N, H_out, C)
    return jnp.transpose(y2, (1, 2, 0, 3))


# --------------------------------------------------------------------------------------
# Deterministic synthetic parameters (shapes of torchvision fcn_resnet50, num_classes=3)
# --------------------------------------------------------------------------------------

class ParamGen:
    def __init__(self, seed=0):
        self._key = jax.random.PRNGKey(seed)
        self._n = 0

    def _next(self):
        self._n += 1
        return jax.random.fold_in(self._key, self._n)

    def conv(self, kh, kw, cin, cout):
        fan_in = kh * kw * cin
        w = (jax.random.normal(self._next(), (kh, kw, cin, cout), jnp.float32)
             * jnp.sqrt(2.0 / fan_in))
        return w.astype(jnp.bfloat16)   # pre-cast once at build time (MXU-native dtype)

    def bn(self, c, eps=1e-5):
        # eval-mode BatchNorm folded: scale = gamma/sqrt(var+eps), bias = beta - mean*scale
        gamma = 1.0 + 0.1 * jax.random.normal(self._next(), (c,), jnp.float32)
        beta = 0.01 * jax.random.normal(self._next(), (c,), jnp.float32)
        running_mean = jnp.zeros((c,), jnp.float32)
        running_var = jnp.ones((c,), jnp.float32)
        scale = gamma / jnp.sqrt(running_var + eps)
        bias = beta - running_mean * scale
        return (scale, bias)

    def bias(self, c):
        return 0.01 * jax.random.normal(self._next(), (c,), jnp.float32)


def build_fcn_resnet50_params(num_classes=3, seed=0):
    pg = ParamGen(seed)
    params = {'conv1_w': pg.conv(7, 7, 3, 64), 'bn1': pg.bn(64)}
    inplanes, dilation = 64, 1
    # (planes, num_blocks, stride, replace_stride_with_dilation)
    layer_cfg = [(64, 3, 1, False), (128, 4, 2, False), (256, 6, 2, True), (512, 3, 2, True)]
    layers = []
    for planes, nblocks, stride, dilate in layer_cfg:
        previous_dilation = dilation
        if dilate:
            dilation *= stride
            stride = 1
        blocks = []
        for b in range(nblocks):
            blk_stride = stride if b == 0 else 1
            blk_dilation = previous_dilation if b == 0 else dilation
            p = {
                'conv1_w': pg.conv(1, 1, inplanes, planes), 'bn1': pg.bn(planes),
                'conv2_w': pg.conv(3, 3, planes, planes), 'bn2': pg.bn(planes),
                'conv3_w': pg.conv(1, 1, planes, planes * 4), 'bn3': pg.bn(planes * 4),
                'stride': blk_stride, 'dilation': blk_dilation,
            }
            if b == 0 and (stride != 1 or inplanes != planes * 4):
                p['down_w'] = pg.conv(1, 1, inplanes, planes * 4)
                p['down_bn'] = pg.bn(planes * 4)
            blocks.append(p)
            inplanes = planes * 4
        layers.append(blocks)
    params['layers'] = layers
    # FCNHead: Conv3x3(2048->512, bias=False) + BN + ReLU + Dropout + Conv1x1(512->classes)
    params['head_conv_w'] = pg.conv(3, 3, 2048, 512)
    params['head_bn'] = pg.bn(512)
    params['cls_w'] = pg.conv(1, 1, 512, num_classes)
    params['cls_b'] = pg.bias(num_classes)
    return params


# --------------------------------------------------------------------------------------
# Forward pass
# --------------------------------------------------------------------------------------

def bottleneck_forward(x, p):
    out = conv2d_bn_act(x, p['conv1_w'], *p['bn1'], relu=True)
    out = conv2d_bn_act(out, p['conv2_w'], *p['bn2'], stride=p['stride'],
                        padding=p['dilation'], dilation=p['dilation'], relu=True)
    if 'down_w' in p:
        identity = conv2d_bn_act(x, p['down_w'], *p['down_bn'],
                                 stride=p['stride'], relu=False)
    else:
        identity = x
    # conv3 + BN + residual add + ReLU fused into a single matmul epilogue
    return conv2d_bn_act(out, p['conv3_w'], *p['bn3'], relu=True, residual=identity)


def fcn_resnet50_forward(params, x_nchw):
    """x_nchw: [N, C, H, W] (PyTorch layout). Returns sigmoid(fcn(x)['out']) in NCHW."""
    N, C, H, W = x_nchw.shape
    if C != 3:  # torch.cat((x, x, x), 1)
        x_nchw = jnp.concatenate([x_nchw, x_nchw, x_nchw], axis=1)
    x = jnp.transpose(x_nchw, (0, 2, 3, 1)).astype(jnp.bfloat16)  # NCHW -> NHWC, bf16 activations

    # ResNet-50 stem
    x = conv2d_bn_act(x, params['conv1_w'], *params['bn1'],
                      stride=2, padding=3, relu=True)
    x = maxpool_3x3_s2_p1(x)

    # layer1..layer4 (layer3/4 dilated, FCN backbone)
    for blocks in params['layers']:
        for p in blocks:
            x = bottleneck_forward(x, p)

    # FCN head (Dropout(0.1) is identity in eval mode)
    x = conv2d_bn_act(x, params['head_conv_w'], *params['head_bn'],
                      stride=1, padding=1, relu=True)
    nc = params['cls_w'].shape[-1]
    x = conv2d_bn_act(x, params['cls_w'], jnp.ones((nc,), jnp.float32), params['cls_b'],
                      relu=False)

    # bilinear upsample to input size (align_corners=False) with the sigmoid fused into the
    # final matmul epilogue (applied lane-dense in NHWC before the layout transpose)
    y = bilinear_resize_sigmoid(x, H, W)          # [N, H, W, nc] f32 in [0, 1]
    return jnp.transpose(y, (0, 3, 1, 2))         # NHWC -> NCHW


if __name__ == "__main__":
    key = jax.random.PRNGKey(0)
    x = jax.random.normal(key, (2, 1, 16, 16), jnp.float32)  # NCHW, in_channels=1
    params = build_fcn_resnet50_params(num_classes=3, seed=0)
    y = fcn_resnet50_forward(params, x)
    y = jax.block_until_ready(y)
    assert y.shape == (2, 3, 16, 16), y.shape
    assert bool(jnp.all(jnp.isfinite(y)))
    assert bool(jnp.all((y >= 0.0) & (y <= 1.0)))
    print("KERNEL_OK")
</pallas_src>

<mosaic_0001>
module attributes {stable_mosaic.version = 11 : i64} {
  func.func @_mm_fused_kernel(%arg0: i32, %arg1: i32, %arg2: i32, %arg3: memref<128x256xbf16, #tpu.memory_space<vmem>>, %arg4: memref<256x128xbf16, #tpu.memory_space<vmem>>, %arg5: memref<1x128xf32, #tpu.memory_space<vmem>>, %arg6: memref<1x128xf32, #tpu.memory_space<vmem>>, %arg7: memref<128x128xbf16, #tpu.memory_space<vmem>>, %arg8: memref<128x128xf32, #tpu.memory_space<vmem>>) attributes {dimension_semantics = [#tpu.dimension_semantics<parallel>, #tpu.dimension_semantics<parallel>, #tpu.dimension_semantics<arbitrary>], iteration_bounds = array<i64: 1, 1, 1>, scalar_prefetch = 0 : i64, scratch_operands = 1 : i64, tpu.core_type = #tpu.core_type<tc>, window_params = [{transform_indices = @transform_0, window_bounds = array<i64: 128, 256>}, {transform_indices = @transform_1, window_bounds = array<i64: 256, 128>}, {transform_indices = @transform_2, window_bounds = array<i64: 1, 128>}, {transform_indices = @transform_3, window_bounds = array<i64: 1, 128>}, {transform_indices = @transform_4, window_bounds = array<i64: 128, 128>}]} {
    %c0_i32 = arith.constant 0 : i32
    %0 = arith.cmpi eq, %arg2, %c0_i32 : i32
    %1 = arith.extui %0 : i1 to i32
    %c0_i32_0 = arith.constant 0 : i32
    %2 = arith.cmpi ne, %1, %c0_i32_0 : i32
    scf.if %2 {
      %cst_10 = arith.constant 0.000000e+00 : f32
      %12 = vector.broadcast %cst_10 : f32 to vector<128x128xf32>
      %c0_11 = arith.constant 0 : index
      %c0_12 = arith.constant 0 : index
      %13 = vector.load %arg8[%c0_11, %c0_12] : memref<128x128xf32, #tpu.memory_space<vmem>>, vector<128x128xf32>
      tpu.vector_store %arg8[%c0_11, %c0_12], %12 {strides = array<i32>} : memref<128x128xf32, #tpu.memory_space<vmem>>, vector<128x128xf32>,
    } else {
    }
    %c0 = arith.constant 0 : index
    %c0_1 = arith.constant 0 : index
    %3 = vector.load %arg8[%c0, %c0_1] : memref<128x128xf32, #tpu.memory_space<vmem>>, vector<128x128xf32>
    %c0_2 = arith.constant 0 : index
    %c0_3 = arith.constant 0 : index
    %4 = vector.load %arg3[%c0_2, %c0_3] : memref<128x256xbf16, #tpu.memory_space<vmem>>, vector<128x256xbf16>
    %c0_4 = arith.constant 0 : index
    %c0_5 = arith.constant 0 : index
    %5 = vector.load %arg4[%c0_4, %c0_5] : memref<256x128xbf16, #tpu.memory_space<vmem>>, vector<256x128xbf16>
    %cst = arith.constant dense<0.000000e+00> : vector<128x128xf32>
    %6 = tpu.matmul %4, %5, %cst {dimension_numbers = #tpu.dot_dimension_numbers<[1], [0], [0], [1], [0, 0, 1, 1], [], []>} : vector<128x256xbf16>, vector<256x128xbf16>, vector<128x128xf32> -> vector<128x128xf32>
    %7 = arith.addf %3, %6 : vector<128x128xf32>
    %c0_6 = arith.constant 0 : index
    %c0_7 = arith.constant 0 : index
    %8 = vector.load %arg8[%c0_6, %c0_7] : memref<128x128xf32, #tpu.memory_space<vmem>>, vector<128x128xf32>
    tpu.vector_store %arg8[%c0_6, %c0_7], %7 {strides = array<i32>} : memref<128x128xf32, #tpu.memory_space<vmem>>, vector<128x128xf32>,
    %c0_i32_8 = arith.constant 0 : i32
    %9 = arith.cmpi eq, %arg2, %c0_i32_8 : i32
    %10 = arith.extui %9 : i1 to i32
    %c0_i32_9 = arith.constant 0 : i32
    %11 = arith.cmpi ne, %10, %c0_i32_9 : i32
    scf.if %11 {
      %c0_10 = arith.constant 0 : index
      %c0_11 = arith.constant 0 : index
      %12 = vector.load %arg8[%c0_10, %c0_11] : memref<128x128xf32, #tpu.memory_space<vmem>>, vector<128x128xf32>
      %c0_12 = arith.constant 0 : index
      %c0_13 = arith.constant 0 : index
      %13 = vector.load %arg5[%c0_12, %c0_13] : memref<1x128xf32, #tpu.memory_space<vmem>>, vector<1x128xf32>
      %14 = vector.broadcast %13 : vector<1x128xf32> to vector<128x128xf32>
      %15 = arith.mulf %12, %14 : vector<128x128xf32>
      %c0_14 = arith.constant 0 : index
      %c0_15 = arith.constant 0 : index
      %16 = vector.load %arg6[%c0_14, %c0_15] : memref<1x128xf32, #tpu.memory_space<vmem>>, vector<1x128xf32>
      %17 = vector.broadcast %16 : vector<1x128xf32> to vector<128x128xf32>
      %18 = arith.addf %15, %17 : vector<128x128xf32>
      %cst_16 = arith.constant 0.000000e+00 : f32
      %19 = vector.broadcast %cst_16 : f32 to vector<128x128xf32>
      %20 = arith.maximumf %18, %19 : vector<128x128xf32>
      %21 = arith.truncf %20 : vector<128x128xf32> to vector<128x128xbf16>
      %c0_17 = arith.constant 0 : index
      %c0_18 = arith.constant 0 : index
      %22 = vector.load %arg7[%c0_17, %c0_18] : memref<128x128xbf16, #tpu.memory_space<vmem>>, vector<128x128xbf16>
      tpu.vector_store %arg7[%c0_17, %c0_18], %21 {strides = array<i32>} : memref<128x128xbf16, #tpu.memory_space<vmem>>, vector<128x128xbf16>,
    } else {
    }
    return
  }
  func.func @transform_0(%arg0: i32, %arg1: i32, %arg2: i32) -> (i32, i32) {
    %c0_i32 = arith.constant 0 : i32
    return %arg0, %arg2 : i32, i32
  }
  func.func @transform_1(%arg0: i32, %arg1: i32, %arg2: i32) -> (i32, i32) {
    %c0_i32 = arith.constant 0 : i32
    return %arg2, %arg1 : i32, i32
  }
  func.func @transform_2(%arg0: i32, %arg1: i32, %arg2: i32) -> (i32, i32) {
    %c0_i32 = arith.constant 0 : i32
    %c0_i32_0 = arith.constant 0 : i32
    return %c0_i32, %arg1 : i32, i32
  }
  func.func @transform_3(%arg0: i32, %arg1: i32, %arg2: i32) -> (i32, i32) {
    %c0_i32 = arith.constant 0 : i32
    %c0_i32_0 = arith.constant 0 : i32
    return %c0_i32, %arg1 : i32, i32
  }
  func.func @transform_4(%arg0: i32, %arg1: i32, %arg2: i32) -> (i32, i32) {
    %c0_i32 = arith.constant 0 : i32
    return %arg0, %arg1 : i32, i32
  }
}

</mosaic_0001>

<llo_original>
// kernel: tpu_custom_call.1
$region0: #{tpu_custom_call.1}
  #allocation0 [shape = 'u32[]', space=smem, size = 0x4, offset = 0x4, fixed_abs, tag = 'smem constant byte address 0x4 - core index']
  #allocation1 [shape = 'u32[144,128]{1,0:T(1,128)}', space=vmem, size = 0x12000, scoped, tag = 'internal scratch']
  #allocation2 [shape = 'f32[128,128]{1,0:T(8,128)}', space=vmem, size = 0x10000, scoped, tag = 'scratch operand']
  %s0 = inlined_call_operand.hbm [shape: bf16[128,256], index: 0, kind: input, shape index: {}]
  %s1 = inlined_call_operand.hbm [shape: bf16[256,128], index: 1, kind: input, shape index: {}]
  %s2 = inlined_call_operand.vmem [shape: f32[1,128], index: 2, kind: input, shape index: {}]
  %s3 = inlined_call_operand.vmem [shape: f32[1,128], index: 3, kind: input, shape index: {}]
  %s4 = inlined_call_operand.hbm [shape: bf16[128,128], index: 4, kind: output, shape index: {}]
  %s5 = sld [smem:[#allocation0]]
  $region42: #{tpu_custom_call.1} parent=0
    _
  %s7 = ssub.s32 1, %s5
  %s8 = scalar_select 0, %s7, %s5
  $region1: #{tpu_custom_call.1} parent=0
    #allocation3 [shape = 'u8[65536]{0}', space=vmem, size = 0x10000, scoped, tag = 'input window, operand 0, single buffered']
    #allocation4 [shape = 's32[1]{0}', space=sflag, size = 0x4, scoped, tag = 'scoped memory for tpu_custom_call.1']
    #allocation5 [shape = 's32[1]{0}', space=sflag, size = 0x4, scoped, tag = 'scoped memory for tpu_custom_call.1']
    #allocation6 [shape = 'u8[65536]{0}', space=vmem, size = 0x10000, scoped, tag = 'input window, operand 1, single buffered']
    #allocation7 [shape = 's32[1]{0}', space=sflag, size = 0x4, scoped, tag = 'scoped memory for tpu_custom_call.1']
    #allocation8 [shape = 'u8[32768]{0}', space=vmem, size = 0x8000, scoped, tag = 'output window, operand 0, single buffered']
    %9 = vsyncpa [#allocation4], 0
    %10 = vsyncpa [#allocation7], 0
    %11 = vsyncpa [#allocation5], 0
    // Predicated region
    $region2: #{tpu_custom_call.1} parent=1 // pred_check
      _
    $region3: #{tpu_custom_call.1} parent=1 // pred_check_branch
      %13 = sbr.rel (0) target = $region5
    $region4: #{tpu_custom_call.1} parent=1 // pred_region
      %s15 = ssub.s32 2048, 2048
      %16 = vsyncadd [#allocation4], %s15
      %s17 = sshll.u32 [#allocation3], 4
      %s18 = int_to_ptr.vmem [resolvable:$true] %s17
      %23 = dma.hbm_to_vmem [thread:$0]  %s0, 2048, %s18, [#allocation4], 128, 128, 8
    $region5: #{tpu_custom_call.1} parent=1 // pred_fallthru
      _
    // Predicated region
    $region6: #{tpu_custom_call.1} parent=1 // pred_check
      _
    $region7: #{tpu_custom_call.1} parent=1 // pred_check_branch
      %25 = sbr.rel (0) target = $region9
    $region8: #{tpu_custom_call.1} parent=1 // pred_region
      %s27 = ssub.s32 2048, 2048
      %28 = vsyncadd [#allocation7], %s27
      %s29 = sshll.u32 [#allocation6], 4
      %s30 = int_to_ptr.vmem [resolvable:$true] %s29
      %35 = dma.hbm_to_vmem [thread:$0]  %s1, 2048, %s30, [#allocation7], 64, 64, 4
    $region9: #{tpu_custom_call.1} parent=1 // pred_fallthru
      _
    // Predicated region
    $region10: #{tpu_custom_call.1} parent=1 // pred_check
      _
    $region11: #{tpu_custom_call.1} parent=1 // pred_check_branch
      %37 = sbr.rel (0) target = $region13
    $region12: #{tpu_custom_call.1} parent=1 // pred_region
      _
    $region13: #{tpu_custom_call.1} parent=1 // pred_fallthru
      _
    // Predicated region
    $region14: #{tpu_custom_call.1} parent=1 // pred_check
      _
    $region15: #{tpu_custom_call.1} parent=1 // pred_check_branch
      %39 = sbr.rel (0) target = $region17
    $region16: #{tpu_custom_call.1} parent=1 // pred_region
      _
    $region17: #{tpu_custom_call.1} parent=1 // pred_fallthru
      _
    // Predicated region
    $region18: #{tpu_custom_call.1} parent=1 // pred_check
      _
    $region19: #{tpu_custom_call.1} parent=1 // pred_check_branch
      %41 = sbr.rel (0) target = $region21
    $region20: #{tpu_custom_call.1} parent=1 // pred_region
      %42 = dma.done [#allocation4], 2048
    $region21: #{tpu_custom_call.1} parent=1 // pred_fallthru
      _
    // Predicated region
    $region22: #{tpu_custom_call.1} parent=1 // pred_check
      _
    $region23: #{tpu_custom_call.1} parent=1 // pred_check_branch
      %44 = sbr.rel (0) target = $region25
    $region24: #{tpu_custom_call.1} parent=1 // pred_region
      %45 = dma.done [#allocation7], 2048
    $region25: #{tpu_custom_call.1} parent=1 // pred_fallthru
      _
    %p47 = scmp.eq.s32.totalorder 0, 0
    // Predicated region
    $region26: #{tpu_custom_call.1} parent=1 // pred_check
      %p48 = pneg %p47
    $region27: #{tpu_custom_call.1} parent=1 // pred_check_branch
      %50 = sbr.rel (%p48) target = $region29
    $region28: #{tpu_custom_call.1} parent=1 // pred_region
      %51 = vst [vmem:[#allocation2] sm:$0xff] 0.0
      %52 = vst [vmem:[#allocation2 + $0x8] sm:$0xff] 0.0
      %53 = vst [vmem:[#allocation2 + $0x10] sm:$0xff] 0.0
      %54 = vst [vmem:[#allocation2 + $0x18] sm:$0xff] 0.0
      %55 = vst [vmem:[#allocation2 + $0x20] sm:$0xff] 0.0
      %56 = vst [vmem:[#allocation2 + $0x28] sm:$0xff] 0.0
      %57 = vst [vmem:[#allocation2 + $0x30] sm:$0xff] 0.0
      %58 = vst [vmem:[#allocation2 + $0x38] sm:$0xff] 0.0
      %59 = vst [vmem:[#allocation2 + $0x40] sm:$0xff] 0.0
      %60 = vst [vmem:[#allocation2 + $0x48] sm:$0xff] 0.0
      %61 = vst [vmem:[#allocation2 + $0x50] sm:$0xff] 0.0
      %62 = vst [vmem:[#allocation2 + $0x58] sm:$0xff] 0.0
      %63 = vst [vmem:[#allocation2 + $0x60] sm:$0xff] 0.0
      %64 = vst [vmem:[#allocation2 + $0x68] sm:$0xff] 0.0
      %65 = vst [vmem:[#allocation2 + $0x70] sm:$0xff] 0.0
      %66 = vst [vmem:[#allocation2 + $0x78] sm:$0xff] 0.0
    $region29: #{tpu_custom_call.1} parent=1 // pred_fallthru
      _
    %v67 = vld [vmem:[#allocation2] sm:$0xff]
    %v68 = vld [vmem:[#allocation2 + $0x8] sm:$0xff]
    %v69 = vld [vmem:[#allocation2 + $0x10] sm:$0xff]
    %v70 = vld [vmem:[#allocation2 + $0x18] sm:$0xff]
    %v71 = vld [vmem:[#allocation2 + $0x20] sm:$0xff]
    %v72 = vld [vmem:[#allocation2 + $0x28] sm:$0xff]
    %v73 = vld [vmem:[#allocation2 + $0x30] sm:$0xff]
    %v74 = vld [vmem:[#allocation2 + $0x38] sm:$0xff]
    %v75 = vld [vmem:[#allocation2 + $0x40] sm:$0xff]
    %v76 = vld [vmem:[#allocation2 + $0x48] sm:$0xff]
    %v77 = vld [vmem:[#allocation2 + $0x50] sm:$0xff]
    %v78 = vld [vmem:[#allocation2 + $0x58] sm:$0xff]
    %v79 = vld [vmem:[#allocation2 + $0x60] sm:$0xff]
    %v80 = vld [vmem:[#allocation2 + $0x68] sm:$0xff]
    %v81 = vld [vmem:[#allocation2 + $0x70] sm:$0xff]
    %v82 = vld [vmem:[#allocation2 + $0x78] sm:$0xff]
    %v83 = vld [vmem:[#allocation3] sm:$0xff]
    %v84 = vld [vmem:[#allocation3 + $0x8] sm:$0xff]
    %v85 = vld [vmem:[#allocation3 + $0x10] sm:$0xff]
    %v86 = vld [vmem:[#allocation3 + $0x18] sm:$0xff]
    %v87 = vld [vmem:[#allocation3 + $0x20] sm:$0xff]
    %v88 = vld [vmem:[#allocation3 + $0x28] sm:$0xff]
    %v89 = vld [vmem:[#allocation3 + $0x30] sm:$0xff]
    %v90 = vld [vmem:[#allocation3 + $0x38] sm:$0xff]
    %v91 = vld [vmem:[#allocation3 + $0x40] sm:$0xff]
    %v92 = vld [vmem:[#allocation3 + $0x48] sm:$0xff]
    %v93 = vld [vmem:[#allocation3 + $0x50] sm:$0xff]
    %v94 = vld [vmem:[#allocation3 + $0x58] sm:$0xff]
    %v95 = vld [vmem:[#allocation3 + $0x60] sm:$0xff]
    %v96 = vld [vmem:[#allocation3 + $0x68] sm:$0xff]
    %v97 = vld [vmem:[#allocation3 + $0x70] sm:$0xff]
    %v98 = vld [vmem:[#allocation3 + $0x78] sm:$0xff]
    %v99 = vld [vmem:[#allocation6] sm:$0xf]
    %v100 = vld [vmem:[#allocation6 + $0x4] sm:$0xf]
    %v101 = vld [vmem:[#allocation6 + $0x8] sm:$0xf]
    %v102 = vld [vmem:[#allocation6 + $0xc] sm:$0xf]
    %v103 = vld [vmem:[#allocation6 + $0x10] sm:$0xf]
    %v104 = vld [vmem:[#allocation6 + $0x14] sm:$0xf]
    %v105 = vld [vmem:[#allocation6 + $0x18] sm:$0xf]
    %v106 = vld [vmem:[#allocation6 + $0x1c] sm:$0xf]
    %v107 = vld [vmem:[#allocation6 + $0x20] sm:$0xf]
    %v108 = vld [vmem:[#allocation6 + $0x24] sm:$0xf]
    %v109 = vld [vmem:[#allocation6 + $0x28] sm:$0xf]
    %v110 = vld [vmem:[#allocation6 + $0x2c] sm:$0xf]
    %v111 = vld [vmem:[#allocation6 + $0x30] sm:$0xf]
    %v112 = vld [vmem:[#allocation6 + $0x34] sm:$0xf]
    %v113 = vld [vmem:[#allocation6 + $0x38] sm:$0xf]
    %v114 = vld [vmem:[#allocation6 + $0x3c] sm:$0xf]
    %v115 = vld [vmem:[#allocation6 + $0x40] sm:$0xf]
    %v116 = vld [vmem:[#allocation6 + $0x44] sm:$0xf]
    %v117 = vld [vmem:[#allocation6 + $0x48] sm:$0xf]
    %v118 = vld [vmem:[#allocation6 + $0x4c] sm:$0xf]
    %v119 = vld [vmem:[#allocation6 + $0x50] sm:$0xf]
    %v120 = vld [vmem:[#allocation6 + $0x54] sm:$0xf]
    %v121 = vld [vmem:[#allocation6 + $0x58] sm:$0xf]
    %v122 = vld [vmem:[#allocation6 + $0x5c] sm:$0xf]
    %v123 = vld [vmem:[#allocation6 + $0x60] sm:$0xf]
    %v124 = vld [vmem:[#allocation6 + $0x64] sm:$0xf]
    %v125 = vld [vmem:[#allocation6 + $0x68] sm:$0xf]
    %v126 = vld [vmem:[#allocation6 + $0x6c] sm:$0xf]
    %v127 = vld [vmem:[#allocation6 + $0x70] sm:$0xf]
    %v128 = vld [vmem:[#allocation6 + $0x74] sm:$0xf]
    %v129 = vld [vmem:[#allocation6 + $0x78] sm:$0xf]
    %v130 = vld [vmem:[#allocation6 + $0x7c] sm:$0xf]
    %v147 = vunpack.c.l.b16 %v83
    %v148 = vunpack.c.h.b16 %v83
    %v149 = vunpack.c.l.b16 %v84
    %v150 = vunpack.c.h.b16 %v84
    %v151 = vunpack.c.l.b16 %v85
    %v152 = vunpack.c.h.b16 %v85
    %v153 = vunpack.c.l.b16 %v86
    %v154 = vunpack.c.h.b16 %v86
    %v155 = vunpack.c.l.b16 %v87
    %v156 = vunpack.c.h.b16 %v87
    %v157 = vunpack.c.l.b16 %v88
    %v158 = vunpack.c.h.b16 %v88
    %v159 = vunpack.c.l.b16 %v89
    %v160 = vunpack.c.h.b16 %v89
    %v161 = vunpack.c.l.b16 %v90
    %v162 = vunpack.c.h.b16 %v90
    %v163 = vunpack.c.l.b16 %v91
    %v164 = vunpack.c.h.b16 %v91
    %v165 = vunpack.c.l.b16 %v92
    %v166 = vunpack.c.h.b16 %v92
    %v167 = vunpack.c.l.b16 %v93
    %v168 = vunpack.c.h.b16 %v93
    %v169 = vunpack.c.l.b16 %v94
    %v170 = vunpack.c.h.b16 %v94
    %v171 = vunpack.c.l.b16 %v95
    %v172 = vunpack.c.h.b16 %v95
    %v173 = vunpack.c.l.b16 %v96
    %v174 = vunpack.c.h.b16 %v96
    %v175 = vunpack.c.l.b16 %v97
    %v176 = vunpack.c.h.b16 %v97
    %v177 = vunpack.c.l.b16 %v98
    %v178 = vunpack.c.h.b16 %v98
    %v179 = vpack.c.b16 %v149, %v147
    %v180 = vpack.c.b16 %v150, %v148
    %v181 = vpack.c.b16 %v153, %v151
    %v182 = vpack.c.b16 %v154, %v152
    %v183 = vpack.c.b16 %v157, %v155
    %v184 = vpack.c.b16 %v158, %v156
    %v185 = vpack.c.b16 %v161, %v159
    %v186 = vpack.c.b16 %v162, %v160
    %v187 = vpack.c.b16 %v165, %v163
    %v188 = vpack.c.b16 %v166, %v164
    %v189 = vpack.c.b16 %v169, %v167
    %v190 = vpack.c.b16 %v170, %v168
    %v191 = vpack.c.b16 %v173, %v171
    %v192 = vpack.c.b16 %v174, %v172
    %v193 = vpack.c.b16 %v177, %v175
    %v194 = vpack.c.b16 %v178, %v176
    %v243 = vunpack.c.l.b16 %v99
    %v244 = vunpack.c.l.b16 %v100
    %v245 = vunpack.c.l.b16 %v101
    %v246 = vunpack.c.l.b16 %v102
    %v247 = vunpack.c.l.b16 %v103
    %v248 = vunpack.c.l.b16 %v104
    %v249 = vunpack.c.l.b16 %v105
    %v250 = vunpack.c.l.b16 %v106
    %v251 = vunpack.c.l.b16 %v107
    %v252 = vunpack.c.l.b16 %v108
    %v253 = vunpack.c.l.b16 %v109
    %v254 = vunpack.c.l.b16 %v110
    %v255 = vunpack.c.l.b16 %v111
    %v256 = vunpack.c.l.b16 %v112
    %v257 = vunpack.c.l.b16 %v113
    %v258 = vunpack.c.l.b16 %v114
    %v259 = vunpack.c.l.b16 %v115
    %v260 = vunpack.c.l.b16 %v116
    %v261 = vunpack.c.l.b16 %v117
    %v262 = vunpack.c.l.b16 %v118
    %v263 = vunpack.c.l.b16 %v119
    %v264 = vunpack.c.l.b16 %v120
    %v265 = vunpack.c.l.b16 %v121
    %v266 = vunpack.c.l.b16 %v122
    %v267 = vunpack.c.l.b16 %v123
    %v268 = vunpack.c.l.b16 %v124
    %v269 = vunpack.c.l.b16 %v125
    %v270 = vunpack.c.l.b16 %v126
    %v271 = vunpack.c.l.b16 %v127
    %v272 = vunpack.c.l.b16 %v128
    %v273 = vunpack.c.l.b16 %v129
    %v274 = vunpack.c.l.b16 %v130
    %v275 = vpack.c.b16 %v244, %v243
    %v276 = vpack.c.b16 %v246, %v245
    %v277 = vpack.c.b16 %v248, %v247
    %v278 = vpack.c.b16 %v250, %v249
    %v279 = vpack.c.b16 %v252, %v251
    %v280 = vpack.c.b16 %v254, %v253
    %v281 = vpack.c.b16 %v256, %v255
    %v282 = vpack.c.b16 %v258, %v257
    %v283 = vpack.c.b16 %v260, %v259
    %v284 = vpack.c.b16 %v262, %v261
    %v285 = vpack.c.b16 %v264, %v263
    %v286 = vpack.c.b16 %v266, %v265
    %v287 = vpack.c.b16 %v268, %v267
    %v288 = vpack.c.b16 %v270, %v269
    %v289 = vpack.c.b16 %v272, %v271
    %v290 = vpack.c.b16 %v274, %v273
    %307 = vmatprep.subr.bf16.mxu0 0
    %308 = vmatpush1.bf16.msra.mxu0 %v275
    %309 = vmatprep.subr.bf16.mxu0 0
    %310 = vmatpush1.bf16.msra.mxu0 %v276
    %311 = vmatprep.subr.bf16.mxu0 0
    %312 = vmatpush1.bf16.msra.mxu0 %v277
    %313 = vmatprep.subr.bf16.mxu0 0
    %314 = vmatpush1.bf16.msra.mxu0 %v278
    %315 = vmatprep.subr.bf16.mxu0 0
    %316 = vmatpush1.bf16.msra.mxu0 %v279
    %317 = vmatprep.subr.bf16.mxu0 0
    %318 = vmatpush1.bf16.msra.mxu0 %v280
    %319 = vmatprep.subr.bf16.mxu0 0
    %320 = vmatpush1.bf16.msra.mxu0 %v281
    %321 = vmatprep.subr.bf16.mxu0 0
    %322 = vmatpush1.bf16.msra.mxu0 %v282
    %323 = vmatprep.subr.bf16.mxu0 0
    %324 = vmatpush1.bf16.msra.mxu0 %v283
    %325 = vmatprep.subr.bf16.mxu0 0
    %326 = vmatpush1.bf16.msra.mxu0 %v284
    %327 = vmatprep.subr.bf16.mxu0 0
    %328 = vmatpush1.bf16.msra.mxu0 %v285
    %329 = vmatprep.subr.bf16.mxu0 0
    %330 = vmatpush1.bf16.msra.mxu0 %v286
    %331 = vmatprep.subr.bf16.mxu0 0
    %332 = vmatpush1.bf16.msra.mxu0 %v287
    %333 = vmatprep.subr.bf16.mxu0 0
    %334 = vmatpush1.bf16.msra.mxu0 %v288
    %335 = vmatprep.subr.bf16.mxu0 0
    %336 = vmatpush1.bf16.msra.mxu0 %v289
    %337 = vmatprep.subr.bf16.mxu0 0
    %338 = vmatpush1.bf16.msra.mxu0 %v290
    %339 = vmatprep.mubr.bf16.mxu0 %v180
    %340 = vmatmul.mubr.bf16.gmra.mrb[0].mxu0 %v179
    %v341 = vpop.f32.mrb[0].mxu0
    %v342 = vadd.f32 0.0, %v341
    %v343 = vpop.f32.mrb[0].mxu0
    %v344 = vpop.f32.mrb[0].mxu0
    %v345 = vadd.f32 0.0, %v344
    %v346 = vpop.f32.mrb[0].mxu0
    %347 = vmatprep.mubr.bf16.mxu0 %v182
    %348 = vmatmul.mubr.bf16.gmra.mrb[0].mxu0 %v181
    %v349 = vpop.f32.mrb[0].mxu0
    %v350 = vadd.f32 0.0, %v349
    %v351 = vpop.f32.mrb[0].mxu0
    %v352 = vpop.f32.mrb[0].mxu0
    %v353 = vadd.f32 0.0, %v352
    %v354 = vpop.f32.mrb[0].mxu0
    %355 = vmatprep.mubr.bf16.mxu0 %v184
    %356 = vmatmul.mubr.bf16.gmra.mrb[0].mxu0 %v183
    %v357 = vpop.f32.mrb[0].mxu0
    %v358 = vadd.f32 0.0, %v357
    %v359 = vpop.f32.mrb[0].mxu0
    %v360 = vpop.f32.mrb[0].mxu0
    %v361 = vadd.f32 0.0, %v360
    %v362 = vpop.f32.mrb[0].mxu0
    %363 = vmatprep.mubr.bf16.mxu0 %v186
    %364 = vmatmul.mubr.bf16.gmra.mrb[0].mxu0 %v185
    %v365 = vpop.f32.mrb[0].mxu0
    %v366 = vadd.f32 0.0, %v365
    %v367 = vpop.f32.mrb[0].mxu0
    %v368 = vpop.f32.mrb[0].mxu0
    %v369 = vadd.f32 0.0, %v368
    %v370 = vpop.f32.mrb[0].mxu0
    %371 = vmatprep.mubr.bf16.mxu0 %v188
    %372 = vmatmul.mubr.bf16.gmra.mrb[0].mxu0 %v187
    %v373 = vpop.f32.mrb[0].mxu0
    %v374 = vadd.f32 0.0, %v373
    %v375 = vpop.f32.mrb[0].mxu0
    %v376 = vpop.f32.mrb[0].mxu0
    %v377 = vadd.f32 0.0, %v376
    %v378 = vpop.f32.mrb[0].mxu0
    %379 = vmatprep.mubr.bf16.mxu0 %v190
    %380 = vmatmul.mubr.bf16.gmra.mrb[0].mxu0 %v189
    %v381 = vpop.f32.mrb[0].mxu0
    %v382 = vadd.f32 0.0, %v381
    %v383 = vpop.f32.mrb[0].mxu0
    %v384 = vpop.f32.mrb[0].mxu0
    %v385 = vadd.f32 0.0, %v384
    %v386 = vpop.f32.mrb[0].mxu0
    %387 = vmatprep.mubr.bf16.mxu0 %v192
    %388 = vmatmul.mubr.bf16.gmra.mrb[0].mxu0 %v191
    %v389 = vpop.f32.mrb[0].mxu0
    %v390 = vadd.f32 0.0, %v389
    %v391 = vpop.f32.mrb[0].mxu0
    %v392 = vpop.f32.mrb[0].mxu0
    %v393 = vadd.f32 0.0, %v392
    %v394 = vpop.f32.mrb[0].mxu0
    %395 = vmatprep.mubr.bf16.mxu0 %v194
    %396 = vmatmul.mubr.bf16.gmra.mrb[0].mxu0 %v193
    %v397 = vpop.f32.mrb[0].mxu0
    %v398 = vadd.f32 0.0, %v397
    %v399 = vpop.f32.mrb[0].mxu0
    %v400 = vpop.f32.mrb[0].mxu0
    %v401 = vadd.f32 0.0, %v400
    %v402 = vpop.f32.mrb[0].mxu0
    %403 = vdwg.mxu0
    %v404 = vadd.f32 %v67, %v342
    %v405 = vadd.f32 %v68, %v345
    %v406 = vadd.f32 %v69, %v350
    %v407 = vadd.f32 %v70, %v353
    %v408 = vadd.f32 %v71, %v358
    %v409 = vadd.f32 %v72, %v361
    %v410 = vadd.f32 %v73, %v366
    %v411 = vadd.f32 %v74, %v369
    %v412 = vadd.f32 %v75, %v374
    %v413 = vadd.f32 %v76, %v377
    %v414 = vadd.f32 %v77, %v382
    %v415 = vadd.f32 %v78, %v385
    %v416 = vadd.f32 %v79, %v390
    %v417 = vadd.f32 %v80, %v393
    %v418 = vadd.f32 %v81, %v398
    %v419 = vadd.f32 %v82, %v401
    %420 = vst [vmem:[#allocation2] sm:$0xff] %v404
    %421 = vst [vmem:[#allocation2 + $0x8] sm:$0xff] %v405
    %422 = vst [vmem:[#allocation2 + $0x10] sm:$0xff] %v406
    %423 = vst [vmem:[#allocation2 + $0x18] sm:$0xff] %v407
    %424 = vst [vmem:[#allocation2 + $0x20] sm:$0xff] %v408
    %425 = vst [vmem:[#allocation2 + $0x28] sm:$0xff] %v409
    %426 = vst [vmem:[#allocation2 + $0x30] sm:$0xff] %v410
    %427 = vst [vmem:[#allocation2 + $0x38] sm:$0xff] %v411
    %428 = vst [vmem:[#allocation2 + $0x40] sm:$0xff] %v412
    %429 = vst [vmem:[#allocation2 + $0x48] sm:$0xff] %v413
    %430 = vst [vmem:[#allocation2 + $0x50] sm:$0xff] %v414
    %431 = vst [vmem:[#allocation2 + $0x58] sm:$0xff] %v415
    %432 = vst [vmem:[#allocation2 + $0x60] sm:$0xff] %v416
    %433 = vst [vmem:[#allocation2 + $0x68] sm:$0xff] %v417
    %434 = vst [vmem:[#allocation2 + $0x70] sm:$0xff] %v418
    %435 = vst [vmem:[#allocation2 + $0x78] sm:$0xff] %v419
    // Predicated region
    $region30: #{tpu_custom_call.1} parent=1 // pred_check
      %p436 = pneg %p47
    $region31: #{tpu_custom_call.1} parent=1 // pred_check_branch
      %438 = sbr.rel (%p436) target = $region33
    $region32: #{tpu_custom_call.1} parent=1 // pred_region
      %v439 = vld [vmem:[#allocation2] sm:$0xff]
      %v440 = vld [vmem:[#allocation2 + $0x8] sm:$0xff]
      %v441 = vld [vmem:[#allocation2 + $0x10] sm:$0xff]
      %v442 = vld [vmem:[#allocation2 + $0x18] sm:$0xff]
      %v443 = vld [vmem:[#allocation2 + $0x20] sm:$0xff]
      %v444 = vld [vmem:[#allocation2 + $0x28] sm:$0xff]
      %v445 = vld [vmem:[#allocation2 + $0x30] sm:$0xff]
      %v446 = vld [vmem:[#allocation2 + $0x38] sm:$0xff]
      %v447 = vld [vmem:[#allocation2 + $0x40] sm:$0xff]
      %v448 = vld [vmem:[#allocation2 + $0x48] sm:$0xff]
      %v449 = vld [vmem:[#allocation2 + $0x50] sm:$0xff]
      %v450 = vld [vmem:[#allocation2 + $0x58] sm:$0xff]
      %v451 = vld [vmem:[#allocation2 + $0x60] sm:$0xff]
      %v452 = vld [vmem:[#allocation2 + $0x68] sm:$0xff]
      %v453 = vld [vmem:[#allocation2 + $0x70] sm:$0xff]
      %v454 = vld [vmem:[#allocation2 + $0x78] sm:$0xff]
      %v455 = vld [vmem:[%s2] sm:$0x1]
      %v457 = vlaneseq
      %v458 = vshrl.u32 %v457, 7
      %v459 = vsub.s32 0, %v458
      %v460 = vrot.slane %v455, %v459
      %v462 = vmul.f32 %v439, %v460
      %v463 = vmul.f32 %v440, %v460
      %v464 = vmul.f32 %v441, %v460
      %v465 = vmul.f32 %v442, %v460
      %v466 = vmul.f32 %v443, %v460
      %v467 = vmul.f32 %v444, %v460
      %v468 = vmul.f32 %v445, %v460
      %v469 = vmul.f32 %v446, %v460
      %v470 = vmul.f32 %v447, %v460
      %v471 = vmul.f32 %v448, %v460
      %v472 = vmul.f32 %v449, %v460
      %v473 = vmul.f32 %v450, %v460
      %v474 = vmul.f32 %v451, %v460
      %v475 = vmul.f32 %v452, %v460
      %v476 = vmul.f32 %v453, %v460
      %v477 = vmul.f32 %v454, %v460
      %v478 = vld [vmem:[%s3] sm:$0x1]
      %v480 = vlaneseq
      %v481 = vshrl.u32 %v480, 7
      %v482 = vsub.s32 0, %v481
      %v483 = vrot.slane %v478, %v482
      %v485 = vadd.f32 %v462, %v483
      %v486 = vadd.f32 %v463, %v483
      %v487 = vadd.f32 %v464, %v483
      %v488 = vadd.f32 %v465, %v483
      %v489 = vadd.f32 %v466, %v483
      %v490 = vadd.f32 %v467, %v483
      %v491 = vadd.f32 %v468, %v483
      %v492 = vadd.f32 %v469, %v483
      %v493 = vadd.f32 %v470, %v483
      %v494 = vadd.f32 %v471, %v483
      %v495 = vadd.f32 %v472, %v483
      %v496 = vadd.f32 %v473, %v483
      %v497 = vadd.f32 %v474, %v483
      %v498 = vadd.f32 %v475, %v483
      %v499 = vadd.f32 %v476, %v483
      %v500 = vadd.f32 %v477, %v483
      %v501 = vmax.f32 %v485, 0.0
      %v502 = vmax.f32 %v486, 0.0
      %v503 = vmax.f32 %v487, 0.0
      %v504 = vmax.f32 %v488, 0.0
      %v505 = vmax.f32 %v489, 0.0
      %v506 = vmax.f32 %v490, 0.0
      %v507 = vmax.f32 %v491, 0.0
      %v508 = vmax.f32 %v492, 0.0
      %v509 = vmax.f32 %v493, 0.0
      %v510 = vmax.f32 %v494, 0.0
      %v511 = vmax.f32 %v495, 0.0
      %v512 = vmax.f32 %v496, 0.0
      %v513 = vmax.f32 %v497, 0.0
      %v514 = vmax.f32 %v498, 0.0
      %v515 = vmax.f32 %v499, 0.0
      %v516 = vmax.f32 %v500, 0.0
      %v517 = vpack.c.bf16 %v502, %v501
      %v518 = vpack.c.bf16 %v504, %v503
      %v519 = vpack.c.bf16 %v506, %v505
      %v520 = vpack.c.bf16 %v508, %v507
      %v521 = vpack.c.bf16 %v510, %v509
      %v522 = vpack.c.bf16 %v512, %v511
      %v523 = vpack.c.bf16 %v514, %v513
      %v524 = vpack.c.bf16 %v516, %v515
      %v533 = vunpack.c.l.b16 %v517
      %v534 = vunpack.c.h.b16 %v517
      %v535 = vunpack.c.l.b16 %v518
      %v536 = vunpack.c.h.b16 %v518
      %v537 = vunpack.c.l.b16 %v519
      %v538 = vunpack.c.h.b16 %v519
      %v539 = vunpack.c.l.b16 %v520
      %v540 = vunpack.c.h.b16 %v520
      %v541 = vunpack.c.l.b16 %v521
      %v542 = vunpack.c.h.b16 %v521
      %v543 = vunpack.c.l.b16 %v522
      %v544 = vunpack.c.h.b16 %v522
      %v545 = vunpack.c.l.b16 %v523
      %v546 = vunpack.c.h.b16 %v523
      %v547 = vunpack.c.l.b16 %v524
      %v548 = vunpack.c.h.b16 %v524
      %v549 = vpack.c.b16 %v533, %v533
      %v550 = vpack.c.b16 %v534, %v534
      %v551 = vpack.c.b16 %v535, %v535
      %v552 = vpack.c.b16 %v536, %v536
      %v553 = vpack.c.b16 %v537, %v537
      %v554 = vpack.c.b16 %v538, %v538
      %v555 = vpack.c.b16 %v539, %v539
      %v556 = vpack.c.b16 %v540, %v540
      %v557 = vpack.c.b16 %v541, %v541
      %v558 = vpack.c.b16 %v542, %v542
      %v559 = vpack.c.b16 %v543, %v543
      %v560 = vpack.c.b16 %v544, %v544
      %v561 = vpack.c.b16 %v545, %v545
      %v562 = vpack.c.b16 %v546, %v546
      %v563 = vpack.c.b16 %v547, %v547
      %v564 = vpack.c.b16 %v548, %v548
      %581 = vst [vmem:[#allocation8] sm:$0xf] %v549
      %582 = vst [vmem:[#allocation8 + $0x4] sm:$0xf] %v550
      %583 = vst [vmem:[#allocation8 + $0x8] sm:$0xf] %v551
      %584 = vst [vmem:[#allocation8 + $0xc] sm:$0xf] %v552
      %585 = vst [vmem:[#allocation8 + $0x10] sm:$0xf] %v553
      %586 = vst [vmem:[#allocation8 + $0x14] sm:$0xf] %v554
      %587 = vst [vmem:[#allocation8 + $0x18] sm:$0xf] %v555
      %588 = vst [vmem:[#allocation8 + $0x1c] sm:$0xf] %v556
      %589 = vst [vmem:[#allocation8 + $0x20] sm:$0xf] %v557
      %590 = vst [vmem:[#allocation8 + $0x24] sm:$0xf] %v558
      %591 = vst [vmem:[#allocation8 + $0x28] sm:$0xf] %v559
      %592 = vst [vmem:[#allocation8 + $0x2c] sm:$0xf] %v560
      %593 = vst [vmem:[#allocation8 + $0x30] sm:$0xf] %v561
      %594 = vst [vmem:[#allocation8 + $0x34] sm:$0xf] %v562
      %595 = vst [vmem:[#allocation8 + $0x38] sm:$0xf] %v563
      %596 = vst [vmem:[#allocation8 + $0x3c] sm:$0xf] %v564
    $region33: #{tpu_custom_call.1} parent=1 // pred_fallthru
      _
    // Predicated region
    $region34: #{tpu_custom_call.1} parent=1 // pred_check
      _
    $region35: #{tpu_custom_call.1} parent=1 // pred_check_branch
      %598 = sbr.rel (0) target = $region37
    $region36: #{tpu_custom_call.1} parent=1 // pred_region
      %s600 = ssub.s32 1024, 1024
      %601 = vsyncadd [#allocation5], %s600
      %s602 = sshll.u32 [#allocation8], 4
      %s603 = int_to_ptr.vmem [resolvable:$true] %s602
      %608 = dma.vmem_to_hbm [thread:$0]  %s603, 1024, %s4, [#allocation5], 64, 64, 4
    $region37: #{tpu_custom_call.1} parent=1 // pred_fallthru
      _
    // Predicated region
    $region38: #{tpu_custom_call.1} parent=1 // pred_check
      _
    $region39: #{tpu_custom_call.1} parent=1 // pred_check_branch
      %610 = sbr.rel (0) target = $region41
    $region40: #{tpu_custom_call.1} parent=1 // pred_region
      %611 = dma.done [#allocation5], 1024
    $region41: #{tpu_custom_call.1} parent=1 // pred_fallthru
      _
    %612 = vsyncpa [#allocation4], 1
    %613 = vsyncpa [#allocation7], 1
    %614 = vsyncpa [#allocation5], 1

</llo_original>
